<compile_context>
chip_gen: v7x
topology: tpu7x:2x2x1
jax: 0.10.0
libtpu: 0.0.40
codegen_flags: <defaults>
</compile_context>

<pallas_src>
import jax
import jax.numpy as jnp
from jax.experimental import pallas as pl
from jax.experimental.pallas import tpu as pltpu


NEG_SLOPE = 0.01  # PyTorch nn.LeakyReLU() default


def _round_up(a, b):
    return ((a + b - 1) // b) * b


def _make_kernel(cin, use_mxu):
    if use_mxu:
        def kernel(x_ref, w_ref, b_ref, o_ref):
            x = x_ref[...]                                   # (Cin, ts) lane-dense
            y = jnp.dot(w_ref[...], x,                       # (P, Cin) @ (Cin, ts)
                        preferred_element_type=jnp.float32)
            y = y + b_ref[...].astype(jnp.float32)           # (P, 1) broadcast
            o_ref[...] = jnp.where(y > 0, y, NEG_SLOPE * y).astype(o_ref.dtype)
    else:
        def kernel(x_ref, w_ref, b_ref, o_ref):
            # VPU path: K is tiny, so do unrolled per-channel broadcast-FMAs
            # with the spatial dim on lanes instead of a lane-padded MXU matmul.
            x = x_ref[...].astype(jnp.float32)               # (Cin, ts)
            acc = w_ref[0].astype(jnp.float32) * x[0:1, :]   # (P,1)*(1,ts)->(P,ts)
            for c in range(1, cin):
                acc = acc + w_ref[c].astype(jnp.float32) * x[c:c + 1, :]
            acc = acc + b_ref[...].astype(jnp.float32)
            o_ref[...] = jnp.where(acc > 0, acc, NEG_SLOPE * acc).astype(o_ref.dtype)
    return kernel


def upconv_sample(x_nchw, weight, bias, *, tile_s=2048, vmem_budget=40 * 2**20):
    """ConvTranspose2d(Cin, Cin//2, kernel=2, stride=2) + LeakyReLU.

    x_nchw : (N, Cin, H, W)   weight : (Cin, Cout, 2, 2)   bias : (Cout,)
    returns: (N, Cout, 2H, 2W)
    """
    N, Cin, H, W = x_nchw.shape
    Cout, kH, kW = weight.shape[1], weight.shape[2], weight.shape[3]
    assert (kH, kW) == (2, 2)
    P = Cout * kH * kW            # columns of the transposed-conv "matmul"
    S = H * W                     # spatial size (lane axis)
    dtype = x_nchw.dtype
    isz = jnp.dtype(dtype).itemsize
    use_mxu = Cin >= 64

    # ---- spatial (lane) tile: multiple of 128, or the full extent ----------
    ts = S if S <= tile_s else max(128, (min(tile_s, S) // 128) * 128)

    def vmem_need(t):
        x_blk = _round_up(Cin, 8) * t * isz
        y_blk = _round_up(P, 8) * t * isz
        if use_mxu:
            w_b = _round_up(P, 8) * _round_up(Cin, 128) * isz
        else:
            w_b = Cin * _round_up(P, 8) * 128 * isz          # (Cin, P, 1) lane-padded
        b_b = _round_up(P, 8) * 128 * isz
        return 2 * (x_blk + y_blk + w_b + b_b)               # double-buffered

    while vmem_need(ts) > vmem_budget:
        nxt = (ts // 2 // 128) * 128
        if nxt < 128:
            break
        ts = nxt

    # Explicit scoped-VMEM limit: above the 16/32 MiB defaults when needed,
    # capped below v7x's 64 MiB physical VMEM.
    vmem_limit = int(min(64 * 2**20, max(32 * 2**20, vmem_need(ts) + (8 << 20))))
    grid = (N, pl.cdiv(S, ts))    # ragged last block handled by Pallas masking

    # ---- operands: NO pre-transpose of the activation -----------------------
    xr = x_nchw.reshape(N, Cin, S)                  # free reshape, native NCHW order
    bm = jnp.repeat(bias, kH * kW).reshape(P, 1)    # bias per (co, kh, kw) column

    if use_mxu:
        # (P, Cin) with P ordered (co, kh, kw) -- tiny parameter-side transpose.
        w_op = jnp.transpose(weight, (1, 2, 3, 0)).reshape(P, Cin)
        w_spec = pl.BlockSpec((P, Cin), lambda n, i: (0, 0))
    else:
        # (Cin, P, 1): w_op[c] is the (P, 1) weight column for input channel c.
        w_op = weight.reshape(Cin, P, 1)            # free reshape
        w_spec = pl.BlockSpec((Cin, P, 1), lambda n, i: (0, 0, 0))

    y_t = pl.pallas_call(
        _make_kernel(Cin, use_mxu),
        out_shape=jax.ShapeDtypeStruct((N, P, S), dtype),
        grid_spec=pltpu.PrefetchScalarGridSpec(
            num_scalar_prefetch=0,
            grid=grid,
            in_specs=[
                pl.BlockSpec((None, Cin, ts), lambda n, i: (n, 0, i)),  # X tile
                w_spec,                                                 # weights
                pl.BlockSpec((P, 1), lambda n, i: (0, 0)),              # bias
            ],
            out_specs=pl.BlockSpec((None, P, ts), lambda n, i: (n, 0, i)),
        ),
        compiler_params=pltpu.CompilerParams(
            dimension_semantics=("parallel", "parallel"),
            vmem_limit_bytes=vmem_limit,
        ),
    )(xr, w_op, bm)

    # ---- scatter (kh, kw) into the 2x spatial grid (NCHW module contract) ----
    # Single fused XLA transpose of the kernel's lane-dense output.
    # TODO(synk): fully fusing this interleave into the kernel (writing
    # (N, Cout, 2H, 2W) directly) requires in-kernel lane/sublane interleaving
    # or stride-2 stores; left to XLA to keep the Mosaic lowering robust.
    y = y_t.reshape(N, Cout, kH, kW, H, W)
    y = jnp.transpose(y, (0, 1, 4, 2, 5, 3)).reshape(N, Cout, H * kH, W * kW)
    return y


def _reference(x_nchw, weight, bias):
    # Independent reference: explicit transposed-conv scatter via einsum.
    N, Cin, H, W = x_nchw.shape
    Cout, kH, kW = weight.shape[1], weight.shape[2], weight.shape[3]
    y = jnp.einsum("nihw,iokl->nohkwl", x_nchw, weight,
                   precision=jax.lax.Precision.HIGHEST)      # (N,Cout,H,kH,W,kW)
    y = y.reshape(N, Cout, H * kH, W * kW) + bias[None, :, None, None]
    return jnp.where(y > 0, y, NEG_SLOPE * y)


if __name__ == "__main__":
    key = jax.random.PRNGKey(0)
    k1, k2, k3, k4, k5, k6 = jax.random.split(key, 6)

    # --- Test 1: module spec shape (small Cin -> VPU path) -------------------
    N, Cin, H, W = 2, 4, 16, 16
    Cout = Cin // 2
    x = jax.random.normal(k1, (N, Cin, H, W), dtype=jnp.float32)
    wgt = jax.random.normal(k2, (Cin, Cout, 2, 2), dtype=jnp.float32) * 0.1
    b = jax.random.normal(k3, (Cout,), dtype=jnp.float32) * 0.1

    out = jax.block_until_ready(upconv_sample(x, wgt, b))
    ref = _reference(x, wgt, b)
    assert out.shape == (N, Cout, 2 * H, 2 * W), out.shape
    assert jnp.allclose(out, ref, atol=1e-5, rtol=1e-5), "VPU-path mismatch"

    # --- Test 2: larger Cin exercises the MXU path ----------------------------
    N2, Cin2, H2, W2 = 1, 128, 16, 16
    Cout2 = Cin2 // 2
    x2 = jax.random.normal(k4, (N2, Cin2, H2, W2), dtype=jnp.float32)
    w2 = jax.random.normal(k5, (Cin2, Cout2, 2, 2), dtype=jnp.float32) * 0.1
    b2 = jax.random.normal(k6, (Cout2,), dtype=jnp.float32) * 0.1

    out2 = jax.block_until_ready(upconv_sample(x2, w2, b2))
    ref2 = _reference(x2, w2, b2)
    assert out2.shape == (N2, Cout2, 2 * H2, 2 * W2), out2.shape
    # loose tolerance: in-kernel dot uses default MXU precision vs f32 reference
    assert jnp.allclose(out2, ref2, atol=2e-2, rtol=2e-2), "MXU-path mismatch"

    print("KERNEL_OK")
</pallas_src>

<mosaic_0001>
module attributes {stable_mosaic.version = 11 : i64} {
  func.func @kernel(%arg0: i32, %arg1: i32, %arg2: memref<1x4x256xf32, #tpu.memory_space<vmem>>, %arg3: memref<4x8x1xf32, #tpu.memory_space<vmem>>, %arg4: memref<8x1xf32, #tpu.memory_space<vmem>>, %arg5: memref<1x8x256xf32, #tpu.memory_space<vmem>>) attributes {dimension_semantics = [#tpu.dimension_semantics<parallel>, #tpu.dimension_semantics<parallel>], iteration_bounds = array<i64: 2, 1>, scalar_prefetch = 0 : i64, scratch_operands = 0 : i64, tpu.core_type = #tpu.core_type<tc>, window_params = [{transform_indices = @transform_0, window_bounds = array<i64: 1, 4, 256>}, {pipeline_mode = #tpu.pipeline_mode<synchronous>, transform_indices = @transform_1, window_bounds = array<i64: 4, 8, 1>}, {pipeline_mode = #tpu.pipeline_mode<synchronous>, transform_indices = @transform_2, window_bounds = array<i64: 8, 1>}, {transform_indices = @transform_3, window_bounds = array<i64: 1, 8, 256>}]} {
    %c0 = arith.constant 0 : index
    %c0_0 = arith.constant 0 : index
    %c0_1 = arith.constant 0 : index
    %0 = vector.load %arg2[%c0, %c0_0, %c0_1] : memref<1x4x256xf32, #tpu.memory_space<vmem>>, vector<1x4x256xf32>
    %1 = vector.shape_cast %0 : vector<1x4x256xf32> to vector<4x256xf32>
    %c0_2 = arith.constant 0 : index
    %c0_3 = arith.constant 0 : index
    %c0_4 = arith.constant 0 : index
    %2 = vector.load %arg3[%c0_2, %c0_3, %c0_4] : memref<4x8x1xf32, #tpu.memory_space<vmem>>, vector<1x8x1xf32>
    %3 = vector.shape_cast %2 : vector<1x8x1xf32> to vector<8x1xf32>
    %4 = vector.extract_strided_slice %1 {offsets = [0, 0], sizes = [1, 256], strides = [1, 1]} : vector<4x256xf32> to vector<1x256xf32>
    %5 = vector.broadcast %3 : vector<8x1xf32> to vector<8x256xf32>
    %6 = vector.broadcast %4 : vector<1x256xf32> to vector<8x256xf32>
    %7 = arith.mulf %5, %6 : vector<8x256xf32>
    %c1 = arith.constant 1 : index
    %c0_5 = arith.constant 0 : index
    %c0_6 = arith.constant 0 : index
    %8 = vector.load %arg3[%c1, %c0_5, %c0_6] : memref<4x8x1xf32, #tpu.memory_space<vmem>>, vector<1x8x1xf32>
    %9 = vector.shape_cast %8 : vector<1x8x1xf32> to vector<8x1xf32>
    %10 = vector.extract_strided_slice %1 {offsets = [1, 0], sizes = [1, 256], strides = [1, 1]} : vector<4x256xf32> to vector<1x256xf32>
    %11 = vector.broadcast %9 : vector<8x1xf32> to vector<8x256xf32>
    %12 = vector.broadcast %10 : vector<1x256xf32> to vector<8x256xf32>
    %13 = arith.mulf %11, %12 : vector<8x256xf32>
    %14 = arith.addf %7, %13 : vector<8x256xf32>
    %c2 = arith.constant 2 : index
    %c0_7 = arith.constant 0 : index
    %c0_8 = arith.constant 0 : index
    %15 = vector.load %arg3[%c2, %c0_7, %c0_8] : memref<4x8x1xf32, #tpu.memory_space<vmem>>, vector<1x8x1xf32>
    %16 = vector.shape_cast %15 : vector<1x8x1xf32> to vector<8x1xf32>
    %17 = vector.extract_strided_slice %1 {offsets = [2, 0], sizes = [1, 256], strides = [1, 1]} : vector<4x256xf32> to vector<1x256xf32>
    %18 = vector.broadcast %16 : vector<8x1xf32> to vector<8x256xf32>
    %19 = vector.broadcast %17 : vector<1x256xf32> to vector<8x256xf32>
    %20 = arith.mulf %18, %19 : vector<8x256xf32>
    %21 = arith.addf %14, %20 : vector<8x256xf32>
    %c3 = arith.constant 3 : index
    %c0_9 = arith.constant 0 : index
    %c0_10 = arith.constant 0 : index
    %22 = vector.load %arg3[%c3, %c0_9, %c0_10] : memref<4x8x1xf32, #tpu.memory_space<vmem>>, vector<1x8x1xf32>
    %23 = vector.shape_cast %22 : vector<1x8x1xf32> to vector<8x1xf32>
    %24 = vector.extract_strided_slice %1 {offsets = [3, 0], sizes = [1, 256], strides = [1, 1]} : vector<4x256xf32> to vector<1x256xf32>
    %25 = vector.broadcast %23 : vector<8x1xf32> to vector<8x256xf32>
    %26 = vector.broadcast %24 : vector<1x256xf32> to vector<8x256xf32>
    %27 = arith.mulf %25, %26 : vector<8x256xf32>
    %28 = arith.addf %21, %27 : vector<8x256xf32>
    %c0_11 = arith.constant 0 : index
    %c0_12 = arith.constant 0 : index
    %29 = vector.load %arg4[%c0_11, %c0_12] : memref<8x1xf32, #tpu.memory_space<vmem>>, vector<8x1xf32>
    %30 = vector.broadcast %29 : vector<8x1xf32> to vector<8x256xf32>
    %31 = arith.addf %28, %30 : vector<8x256xf32>
    %cst = arith.constant 0.000000e+00 : f32
    %32 = vector.broadcast %cst : f32 to vector<8x256xf32>
    %33 = arith.cmpf ogt, %31, %32 : vector<8x256xf32>
    %cst_13 = arith.constant 0.00999999977 : f32
    %34 = vector.broadcast %cst_13 : f32 to vector<8x256xf32>
    %35 = arith.mulf %34, %31 : vector<8x256xf32>
    %36 = arith.select %33, %31, %35 : vector<8x256xi1>, vector<8x256xf32>
    %c0_14 = arith.constant 0 : index
    %c0_15 = arith.constant 0 : index
    %c0_16 = arith.constant 0 : index
    %37 = vector.load %arg5[%c0_14, %c0_15, %c0_16] : memref<1x8x256xf32, #tpu.memory_space<vmem>>, vector<1x8x256xf32>
    %38 = vector.shape_cast %37 : vector<1x8x256xf32> to vector<8x256xf32>
    %39 = vector.shape_cast %36 : vector<8x256xf32> to vector<1x8x256xf32>
    tpu.vector_store %arg5[%c0_14, %c0_15, %c0_16], %39 {strides = array<i32>} : memref<1x8x256xf32, #tpu.memory_space<vmem>>, vector<1x8x256xf32>,
    return
  }
  func.func @transform_0(%arg0: i32, %arg1: i32) -> (i32, i32, i32) {
    %c0_i32 = arith.constant 0 : i32
    %c0_i32_0 = arith.constant 0 : i32
    return %arg0, %c0_i32, %arg1 : i32, i32, i32
  }
  func.func @transform_1(%arg0: i32, %arg1: i32) -> (i32, i32, i32) {
    %c0_i32 = arith.constant 0 : i32
    %c0_i32_0 = arith.constant 0 : i32
    %c0_i32_1 = arith.constant 0 : i32
    %c0_i32_2 = arith.constant 0 : i32
    return %c0_i32, %c0_i32_0, %c0_i32_1 : i32, i32, i32
  }
  func.func @transform_2(%arg0: i32, %arg1: i32) -> (i32, i32) {
    %c0_i32 = arith.constant 0 : i32
    %c0_i32_0 = arith.constant 0 : i32
    %c0_i32_1 = arith.constant 0 : i32
    return %c0_i32, %c0_i32_0 : i32, i32
  }
  func.func @transform_3(%arg0: i32, %arg1: i32) -> (i32, i32, i32) {
    %c0_i32 = arith.constant 0 : i32
    %c0_i32_0 = arith.constant 0 : i32
    return %arg0, %c0_i32, %arg1 : i32, i32, i32
  }
}

</mosaic_0001>

<llo_original>
// kernel: tpu_custom_call.1
$region0: #{tpu_custom_call.1}
  #allocation0 [shape = 'u32[]', space=smem, size = 0x4, offset = 0x4, fixed_abs, tag = 'smem constant byte address 0x4 - core index']
  #allocation1 [shape = 'u32[144,128]{1,0:T(1,128)}', space=vmem, size = 0x12000, scoped, tag = 'internal scratch']
  %s0 = inlined_call_operand.vmem [shape: f32[2,4,256], index: 0, kind: input, shape index: {}]
  %s1 = inlined_call_operand.vmem [shape: f32[4,8,1], index: 1, kind: input, shape index: {}]
  %s2 = inlined_call_operand.vmem [shape: f32[8,1], index: 2, kind: input, shape index: {}]
  %s3 = inlined_call_operand.hbm [shape: f32[2,8,256], index: 3, kind: output, shape index: {}]
  %s4 = sld [smem:[#allocation0]]
  $region45: #{tpu_custom_call.1} parent=0
    _
  %s6 = ssub.s32 1, %s4
  %s7 = scalar_select 0, %s6, %s4
  $region1: #{tpu_custom_call.1} parent=0
    #allocation2 [shape = 'u8[16384]{0}', space=vmem, size = 0x4000, scoped, tag = 'output window, operand 0']
    #allocation3 [shape = 's32[2]{0}', space=sflag, size = 0x8, scoped, tag = 'scoped memory for tpu_custom_call.1']
    %8 = vsyncpa [#allocation3], 0
    %s9 = scalar_lea.sflag [#allocation3], 1
    %10 = vsyncpa %s9, 0
    loop: start=0, step=1, limit=4
    $region2: #{tpu_custom_call.1} parent=1 // loop_pre_header
      _
    $region3: #{tpu_custom_call.1} parent=1 // loop_header
      %s12 = sphi 0, %s16
      %p13 = scmp.ge.s32.totalorder %s12, 4
      %s19 = sphi 0, %s31
      %s20 = sphi 0, %s27
      %s21 = sphi 0, %s19
      %s22 = sphi 0, %s20
      %s23 = sphi 0, %s21
      %s24 = sphi 0, %s22
      %s36 = sphi 0, %s38
      %s39 = sphi 0, %s36
      %s40 = sphi 0, %s39
      %s56 = sphi 0, %s40
      %s60 = sphi 0, %s60
      %s62 = sphi 0, %s60
      %s63 = sphi 0, %s62
      %s77 = sphi 0, %s63
      %s81 = sphi 0, %s81
      %s83 = sphi 0, %s81
      %s84 = sphi 0, %s83
      %s98 = sphi 0, %s84
      %s106 = sphi 0, %s108
      %s109 = sphi 0, %s106
      %s110 = sphi 0, %s109
      %s126 = sphi 0, %s110
    $region4: #{tpu_custom_call.1} parent=1 // loop_header_branch
      %15 = sbr.rel (%p13) target = $region8
    $region5: #{tpu_custom_call.1} parent=1 // loop_body
      %s17 = ssub.s32 %s12, 1
      %s18 = ssub.s32 %s12, 2
      %s25 = sadd.s32 1, %s20
      %p26 = scmp.ge.s32.totalorder %s25, 1
      %s27 = scalar_select %p26, 0, %s25
      %s28 = sadd.s32 1, %s19
      %s29 = scalar_select %p26, %s28, %s19
      %p30 = scmp.ge.s32.totalorder %s29, 2
      %s31 = scalar_select %p30, 0, %s29
      %s32 = ssub.s32 %s19, %s31
      %s33 = ssub.s32 %s20, %s27
      %s34 = sor.u32 %s32, %s33
      %p35 = scmp.eq.s32.totalorder %s34, 0
      %s37 = sadd.s32 %s36, 1
      %s38 = scalar_select %p35, %s36, %s37
      %p41 = pneg %p35
      %p42 = scmp.eq.s32.totalorder %s12, 1
      %p43 = por %p41, %p42
      %p44 = scmp.ne.s32.totalorder %s36, %s39
      %p45 = scmp.eq.s32.totalorder %s12, 0
      %p46 = por %p44, %p45
      %p47 = scmp.ne.s32.totalorder %s36, %s39
      %p48 = scmp.eq.s32.totalorder %s17, 1
      %p49 = por %p47, %p48
      %p50 = scmp.ne.s32.totalorder %s39, %s40
      %p51 = scmp.eq.s32.totalorder %s17, 0
      %p52 = por %p50, %p51
      %p53 = scmp.ne.s32.totalorder %s39, %s40
      %p54 = scmp.eq.s32.totalorder %s18, 1
      %p55 = por %p53, %p54
      %p57 = scmp.ne.s32.totalorder %s40, %s56
      %p58 = scmp.eq.s32.totalorder %s18, 0
      %p59 = por %p57, %p58
      %s61 = sadd.s32 %s60, 1
      %p64 = scmp.eq.s32.totalorder %s12, 1
      %p65 = scmp.ne.s32.totalorder %s60, %s62
      %p66 = scmp.eq.s32.totalorder %s12, 0
      %p67 = por %p65, %p66
      %p68 = scmp.ne.s32.totalorder %s60, %s62
      %p69 = scmp.eq.s32.totalorder %s17, 1
      %p70 = por %p68, %p69
      %p71 = scmp.ne.s32.totalorder %s62, %s63
      %p72 = scmp.eq.s32.totalorder %s17, 0
      %p73 = por %p71, %p72
      %p74 = scmp.ne.s32.totalorder %s62, %s63
      %p75 = scmp.eq.s32.totalorder %s18, 1
      %p76 = por %p74, %p75
      %p78 = scmp.ne.s32.totalorder %s63, %s77
      %p79 = scmp.eq.s32.totalorder %s18, 0
      %p80 = por %p78, %p79
      %s82 = sadd.s32 %s81, 1
      %p85 = scmp.eq.s32.totalorder %s12, 1
      %p86 = scmp.ne.s32.totalorder %s81, %s83
      %p87 = scmp.eq.s32.totalorder %s12, 0
      %p88 = por %p86, %p87
      %p89 = scmp.ne.s32.totalorder %s81, %s83
      %p90 = scmp.eq.s32.totalorder %s17, 1
      %p91 = por %p89, %p90
      %p92 = scmp.ne.s32.totalorder %s83, %s84
      %p93 = scmp.eq.s32.totalorder %s17, 0
      %p94 = por %p92, %p93
      %p95 = scmp.ne.s32.totalorder %s83, %s84
      %p96 = scmp.eq.s32.totalorder %s18, 1
      %p97 = por %p95, %p96
      %p99 = scmp.ne.s32.totalorder %s84, %s98
      %p100 = scmp.eq.s32.totalorder %s18, 0
      %p101 = por %p99, %p100
      %s102 = ssub.s32 %s19, %s31
      %s103 = ssub.s32 %s20, %s27
      %s104 = sor.u32 %s102, %s103
      %p105 = scmp.eq.s32.totalorder %s104, 0
      %s107 = sadd.s32 %s106, 1
      %s108 = scalar_select %p105, %s106, %s107
      %p111 = pneg %p105
      %p112 = scmp.eq.s32.totalorder %s12, 1
      %p113 = por %p111, %p112
      %p114 = scmp.ne.s32.totalorder %s106, %s109
      %p115 = scmp.eq.s32.totalorder %s12, 0
      %p116 = por %p114, %p115
      %p117 = scmp.ne.s32.totalorder %s106, %s109
      %p118 = scmp.eq.s32.totalorder %s17, 1
      %p119 = por %p117, %p118
      %p120 = scmp.ne.s32.totalorder %s109, %s110
      %p121 = scmp.eq.s32.totalorder %s17, 0
      %p122 = por %p120, %p121
      %p123 = scmp.ne.s32.totalorder %s109, %s110
      %p124 = scmp.eq.s32.totalorder %s18, 1
      %p125 = por %p123, %p124
      %p127 = scmp.ne.s32.totalorder %s110, %s126
      %p128 = scmp.eq.s32.totalorder %s18, 0
      %p129 = por %p127, %p128
      %p130 = scmp.le.s32.totalorder 1, %s12
      %p131 = scmp.lt.s32.totalorder %s12, 3
      %p132 = pnand %p130, %p131
      %p133 = pneg %p132
      // Predicated region
      $region9: #{tpu_custom_call.1} parent=5 // pred_check
        _
      $region10: #{tpu_custom_call.1} parent=5 // pred_check_branch
        %135 = sbr.rel (%p132) target = $region12
      $region11: #{tpu_custom_call.1} parent=5 // pred_region
        %s136 = ssub.s32 %s12, 1
        // Predicated region
        $region13: #{tpu_custom_call.1} parent=11 // pred_check
          %p137 = pneg %p73
        $region14: #{tpu_custom_call.1} parent=11 // pred_check_branch
          %139 = sbr.rel (%p137) target = $region16
        $region15: #{tpu_custom_call.1} parent=11 // pred_region
          _
        $region16: #{tpu_custom_call.1} parent=11 // pred_fallthru
          _
        // Predicated region
        $region17: #{tpu_custom_call.1} parent=11 // pred_check
          %p140 = pneg %p94
        $region18: #{tpu_custom_call.1} parent=11 // pred_check_branch
          %142 = sbr.rel (%p140) target = $region20
        $region19: #{tpu_custom_call.1} parent=11 // pred_region
          _
        $region20: #{tpu_custom_call.1} parent=11 // pred_fallthru
          _
      $region12: #{tpu_custom_call.1} parent=5 // pred_fallthru
        _
      %p143 = scmp.lt.s32.totalorder %s12, 2
      // Predicated region
      $region21: #{tpu_custom_call.1} parent=5 // pred_check
        %p144 = pneg %p143
      $region22: #{tpu_custom_call.1} parent=5 // pred_check_branch
        %146 = sbr.rel (%p144) target = $region24
      $region23: #{tpu_custom_call.1} parent=5 // pred_region
        // Predicated region
        $region25: #{tpu_custom_call.1} parent=23 // pred_check
          %p147 = pneg %p46
        $region26: #{tpu_custom_call.1} parent=23 // pred_check_branch
          %149 = sbr.rel (%p147) target = $region28
        $region27: #{tpu_custom_call.1} parent=23 // pred_region
          %s150 = smul.u32 2, %s20
          %p151 = scmp.lt.s32.totalorder %s19, 1
          %s152 = scalar_select %p151, %s19, 1
          %p153 = scmp.lt.s32.totalorder %s150, 1
          %s154 = scalar_select %p153, %s150, 1
          %s155 = smul.addr %s152, 2
          %s156 = sadd.s32 %s154, %s155
          %s157 = smul.addr %s156, 4
          %s158 = scalar_lea.vmem %s0, %s157
          %s159 = smul.u32 2, %s20
        $region28: #{tpu_custom_call.1} parent=23 // pred_fallthru
          _
      $region24: #{tpu_custom_call.1} parent=5 // pred_fallthru
        _
      %p160 = scmp.le.s32.totalorder 1, %s12
      %p161 = scmp.lt.s32.totalorder %s12, 3
      %p162 = pnand %p160, %p161
      %p163 = pneg %p162
      // Predicated region
      $region29: #{tpu_custom_call.1} parent=5 // pred_check
        _
      $region30: #{tpu_custom_call.1} parent=5 // pred_check_branch
        %165 = sbr.rel (%p162) target = $region32
      $region31: #{tpu_custom_call.1} parent=5 // pred_region
        %s166 = ssub.s32 %s12, 1
        %s167 = smul.u32 2, %s22
        %p168 = scmp.lt.s32.totalorder %s21, 1
        %s169 = scalar_select %p168, %s21, 1
        %p170 = scmp.lt.s32.totalorder %s167, 1
        %s171 = scalar_select %p170, %s167, 1
        %s172 = smul.addr %s169, 2
        %s173 = sadd.s32 %s171, %s172
        %s174 = smul.addr %s173, 4
        %s175 = scalar_lea.vmem %s0, %s174
        %p176 = pneg %p52
        %p177 = pneg %p49
        %p178 = pneg %p73
        %p179 = pneg %p70
        %p180 = pneg %p94
        %p181 = pneg %p91
        %p182 = pneg %p122
        %p183 = pneg %p119
        %s184 = sand.u32 %s109, 1
        %s185 = scalar_lea.sflag [#allocation3], %s184
        %s186 = sand.u32 %s109, 1
        %s187 = smul.addr %s186, 16
        %s188 = scalar_lea.vmem [#allocation2], %s187
        %s189 = smul.u32 2, %s22
        %p190 = scmp.lt.s32.totalorder %s21, 1
        %s191 = scalar_select %p190, %s21, 1
        %p192 = scmp.lt.s32.totalorder %s189, 1
        %s193 = scalar_select %p192, %s189, 1
        %s194 = smul.addr %s191, 2
        %s195 = sadd.s32 %s193, %s194
        %s196 = smul.addr %s195, 4
        %s197 = scalar_lea.vmem %s0, %s196
        %s198 = smul.u32 2, %s22
        %s199 = smul.u32 2, %s22
        %v200 = vld [vmem:[%s197] sm:$0xff]
        %v201 = vld [vmem:[%s1] sm:$0xff]
        %203 = vset.pattern.permute.xlu0 0
        %204 = vperm.xlu0 %203, %v201
        %v205 = vpop.permute.xlu0 %204
        %v208 = vlaneseq
        %v209 = vshrl.u32 %v208, 7
        %v210 = vsub.s32 0, %v209
        %v211 = vrot.slane %v200, %v210
        %v212 = vlaneseq
        %v213 = vshrl.u32 %v212, 7
        %v214 = vsub.s32 4, %v213
        %v215 = vrot.slane %v200, %v214
        %v218 = vlaneseq
        %v219 = vshrl.u32 %v218, 7
        %v220 = vsub.s32 0, %v219
        %v221 = vrot.slane %v211, %v220
        %v222 = vlaneseq
        %v223 = vshrl.u32 %v222, 7
        %v224 = vsub.s32 0, %v223
        %v225 = vrot.slane %v215, %v224
        %v226 = vmul.f32 %v205, %v221
        %v227 = vmul.f32 %v205, %v225
        %s228 = scalar_lea.vmem %s1, 8
        %v229 = vld [vmem:[%s228] sm:$0xff]
        %231 = vset.pattern.permute.xlu0 0
        %232 = vperm.xlu0 %231, %v229
        %v233 = vpop.permute.xlu0 %232
        %v235 = vlaneseq
        %v236 = vshrl.u32 %v235, 7
        %v237 = vsub.s32 1, %v236
        %v238 = vrot.slane %v200, %v237
        %v239 = vlaneseq
        %v240 = vshrl.u32 %v239, 7
        %v241 = vsub.s32 5, %v240
        %v242 = vrot.slane %v200, %v241
        %v245 = vlaneseq
        %v246 = vshrl.u32 %v245, 7
        %v247 = vsub.s32 1, %v246
        %v248 = vrot.slane %v238, %v247
        %v249 = vlaneseq
        %v250 = vshrl.u32 %v249, 7
        %v251 = vsub.s32 1, %v250
        %v252 = vrot.slane %v242, %v251
        %v253 = vmul.f32 %v233, %v248
        %v254 = vmul.f32 %v233, %v252
        %v255 = vadd.f32 %v226, %v253
        %v256 = vadd.f32 %v227, %v254
        %s257 = scalar_lea.vmem %s1, 16
        %v258 = vld [vmem:[%s257] sm:$0xff]
        %260 = vset.pattern.permute.xlu0 0
        %261 = vperm.xlu0 %260, %v258
        %v262 = vpop.permute.xlu0 %261
        %v264 = vlaneseq
        %v265 = vshrl.u32 %v264, 7
        %v266 = vsub.s32 2, %v265
        %v267 = vrot.slane %v200, %v266
        %v268 = vlaneseq
        %v269 = vshrl.u32 %v268, 7
        %v270 = vsub.s32 6, %v269
        %v271 = vrot.slane %v200, %v270
        %v274 = vlaneseq
        %v275 = vshrl.u32 %v274, 7
        %v276 = vsub.s32 2, %v275
        %v277 = vrot.slane %v267, %v276
        %v278 = vlaneseq
        %v279 = vshrl.u32 %v278, 7
        %v280 = vsub.s32 2, %v279
        %v281 = vrot.slane %v271, %v280
        %v282 = vmul.f32 %v262, %v277
        %v283 = vmul.f32 %v262, %v281
        %v284 = vadd.f32 %v255, %v282
        %v285 = vadd.f32 %v256, %v283
        %s286 = scalar_lea.vmem %s1, 24
        %v287 = vld [vmem:[%s286] sm:$0xff]
        %289 = vset.pattern.permute.xlu0 0
        %290 = vperm.xlu0 %289, %v287
        %v291 = vpop.permute.xlu0 %290
        %v293 = vlaneseq
        %v294 = vshrl.u32 %v293, 7
        %v295 = vsub.s32 3, %v294
        %v296 = vrot.slane %v200, %v295
        %v297 = vlaneseq
        %v298 = vshrl.u32 %v297, 7
        %v299 = vsub.s32 7, %v298
        %v300 = vrot.slane %v200, %v299
        %v303 = vlaneseq
        %v304 = vshrl.u32 %v303, 7
        %v305 = vsub.s32 3, %v304
        %v306 = vrot.slane %v296, %v305
        %v307 = vlaneseq
        %v308 = vshrl.u32 %v307, 7
        %v309 = vsub.s32 3, %v308
        %v310 = vrot.slane %v300, %v309
        %v311 = vmul.f32 %v291, %v306
        %v312 = vmul.f32 %v291, %v310
        %v313 = vadd.f32 %v284, %v311
        %v314 = vadd.f32 %v285, %v312
        %v315 = vld [vmem:[%s2] sm:$0xff]
        %317 = vset.pattern.permute.xlu0 0
        %318 = vperm.xlu0 %317, %v315
        %v319 = vpop.permute.xlu0 %318
        %v321 = vadd.f32 %v313, %v319
        %v322 = vadd.f32 %v314, %v319
        %vm323 = vcmp.gt.f32.partialorder %v321, 0.0
        %vm324 = vcmp.gt.f32.partialorder %v322, 0.0
        %v325 = vmul.f32 %v321, 0.01
        %v326 = vmul.f32 %v322, 0.01
        %v327 = vsel %vm323, %v321, %v325
        %v328 = vsel %vm324, %v322, %v326
        %329 = vst [vmem:[%s188] sm:$0xff] %v327
        %330 = vst [vmem:[%s188 + $0x8] sm:$0xff] %v328
        %s331 = sand.u32 %s109, 1
        %s332 = scalar_lea.sflag [#allocation3], %s331
        %s333 = sand.u32 %s109, 1
        %s334 = smul.addr %s333, 16
        %s335 = scalar_lea.vmem [#allocation2], %s334
        // Predicated region
        $region33: #{tpu_custom_call.1} parent=31 // pred_check
          %p336 = pneg %p119
        $region34: #{tpu_custom_call.1} parent=31 // pred_check_branch
          %338 = sbr.rel (%p336) target = $region36
        $region35: #{tpu_custom_call.1} parent=31 // pred_region
          %s339 = smul.u32 2, %s22
          %s341 = ssub.s32 256, 256
          %342 = vsyncadd %s332, %s341
          %s343 = smul.addr %s21, 2
          %s344 = sadd.s32 %s339, %s343
          %s345 = smul.addr %s344, 128
          %s346 = scalar_lea.hbm %s3, %s345
          %s348 = sshll.u32 %s335, 4
          %s349 = int_to_ptr.vmem [resolvable:$true] %s348
          %351 = dma.vmem_to_hbm [thread:$0]  %s349, 256, %s346, %s332
        $region36: #{tpu_custom_call.1} parent=31 // pred_fallthru
          _
      $region32: #{tpu_custom_call.1} parent=5 // pred_fallthru
        _
      %p352 = scmp.le.s32.totalorder 2, %s12
      // Predicated region
      $region37: #{tpu_custom_call.1} parent=5 // pred_check
        %p353 = pneg %p352
      $region38: #{tpu_custom_call.1} parent=5 // pred_check_branch
        %355 = sbr.rel (%p353) target = $region40
      $region39: #{tpu_custom_call.1} parent=5 // pred_region
        %s356 = ssub.s32 %s12, 2
        // Predicated region
        $region41: #{tpu_custom_call.1} parent=39 // pred_check
          %p357 = pneg %p125
        $region42: #{tpu_custom_call.1} parent=39 // pred_check_branch
          %359 = sbr.rel (%p357) target = $region44
        $region43: #{tpu_custom_call.1} parent=39 // pred_region
          %s360 = sand.u32 %s110, 1
          %s361 = scalar_lea.sflag [#allocation3], %s360
          %s362 = sand.u32 %s110, 1
          %s363 = smul.addr %s362, 16
          %s364 = scalar_lea.vmem [#allocation2], %s363
          %365 = dma.done %s361, 256
        $region44: #{tpu_custom_call.1} parent=39 // pred_fallthru
          _
      $region40: #{tpu_custom_call.1} parent=5 // pred_fallthru
        _
    $region6: #{tpu_custom_call.1} parent=1 // loop_footer
      %s16 = sadd.s32 1, %s12
    $region7: #{tpu_custom_call.1} parent=1 // loop_footer_branch
      %11 = sbr.rel target = $region3
    $region8: #{tpu_custom_call.1} parent=1 // loop_exit
      _
    %366 = vsyncpa [#allocation3], 1
    %s367 = scalar_lea.sflag [#allocation3], 1
    %368 = vsyncpa %s367, 1

</llo_original>
